<compile_context>
chip_gen: v7x
topology: tpu7x:2x2x1
jax: 0.10.0
libtpu: 0.0.40
codegen_flags: <defaults>
</compile_context>

<pallas_src>
import jax
import jax.numpy as jnp
from jax.experimental import pallas as pl
from jax.experimental.pallas import tpu as pltpu


def nnue_kernel(x_ref,
                w0_ref, b0_ref,
                w1_ref, b1_ref,
                w2_ref, b2_ref,
                w3_ref, b3_ref,
                o_ref):
    # Hot path: 4 matmuls + bias + ReLU on the current batch tile, all in VMEM.
    x = x_ref[...].astype(jnp.float32)                       # (TM, 768)

    h = jnp.dot(x, w0_ref[...], preferred_element_type=jnp.float32) + b0_ref[...]
    h = jnp.maximum(h, 0.0)                                   # nn.ReLU()

    h = jnp.dot(h, w1_ref[...], preferred_element_type=jnp.float32) + b1_ref[...]
    h = jnp.maximum(h, 0.0)

    h = jnp.dot(h, w2_ref[...], preferred_element_type=jnp.float32) + b2_ref[...]
    h = jnp.maximum(h, 0.0)

    out = jnp.dot(h, w3_ref[...], preferred_element_type=jnp.float32) + b3_ref[...]
    o_ref[...] = out.astype(o_ref.dtype)                      # (TM, 1)


def _round_up(n, m):
    return ((n + m - 1) // m) * m


def chess_nnue_forward(x, params, *, tm=1024, input_dtype=jnp.bfloat16,
                       vmem_limit_bytes=48 * 1024 * 1024):
    """x: (B, 768). params: dict of transposed weights/biases (f32).

    Returns (B, 1) float32. Works for arbitrary B (pads the batch up to a tile
    multiple inside the wrapper and slices the result back).
    """
    B, D_in = x.shape
    assert D_in == 768

    # Effective batch tile: big enough to amortize per-step pipeline/DMA setup
    # overhead, but never larger than the (sublane-padded) batch itself.
    tm_eff = max(8, min(_round_up(tm, 8), _round_up(B, 8)))
    B_pad = _round_up(B, tm_eff)

    if input_dtype is not None and x.dtype != input_dtype:
        x = x.astype(input_dtype)   # halves HBM traffic; 0/1 features are exact in bf16
    if B_pad != B:
        x = jnp.pad(x, ((0, B_pad - B), (0, 0)))

    w0, b0 = params["w0"], params["b0"]   # (768, 8), (1, 8)
    w1, b1 = params["w1"], params["b1"]   # (8, 8),   (1, 8)
    w2, b2 = params["w2"], params["b2"]   # (8, 8),   (1, 8)
    w3, b3 = params["w3"], params["b3"]   # (8, 1),   (1, 1)

    # Weights/biases are tiny: each gets its full extent as the block (no tiling).
    full = lambda shp: pl.BlockSpec(shp, lambda i: (0, 0))

    out = pl.pallas_call(
        nnue_kernel,
        out_shape=jax.ShapeDtypeStruct((B_pad, 1), jnp.float32),
        grid_spec=pltpu.PrefetchScalarGridSpec(
            num_scalar_prefetch=0,
            grid=(B_pad // tm_eff,),
            in_specs=[
                pl.BlockSpec((tm_eff, 768), lambda i: (i, 0)),   # x: tiled over batch
                full(w0.shape), full(b0.shape),
                full(w1.shape), full(b1.shape),
                full(w2.shape), full(b2.shape),
                full(w3.shape), full(b3.shape),
            ],
            out_specs=pl.BlockSpec((tm_eff, 1), lambda i: (i, 0)),
        ),
        compiler_params=pltpu.CompilerParams(
            dimension_semantics=("parallel",),
            vmem_limit_bytes=vmem_limit_bytes),
    )(x, w0, b0, w1, b1, w2, b2, w3, b3)

    return out[:B]


def init_params(key):
    """Deterministic init mimicking nn.Linear default (U[-1/sqrt(fan_in), +])."""
    def linear(k, fan_in, fan_out):
        kw, kb = jax.random.split(k)
        bound = 1.0 / jnp.sqrt(fan_in)
        # stored as (in, out) — transposed relative to torch's (out, in)
        w = jax.random.uniform(kw, (fan_in, fan_out), jnp.float32, -bound, bound)
        b = jax.random.uniform(kb, (1, fan_out), jnp.float32, -bound, bound)
        return w, b

    k0, k1, k2, k3 = jax.random.split(key, 4)
    w0, b0 = linear(k0, 768, 8)
    w1, b1 = linear(k1, 8, 8)
    w2, b2 = linear(k2, 8, 8)
    w3, b3 = linear(k3, 8, 1)
    return {"w0": w0, "b0": b0, "w1": w1, "b1": b1,
            "w2": w2, "b2": b2, "w3": w3, "b3": b3}


def reference_forward(x, p):
    h = jnp.maximum(x @ p["w0"] + p["b0"], 0.0)
    h = jnp.maximum(h @ p["w1"] + p["b1"], 0.0)
    h = jnp.maximum(h @ p["w2"] + p["b2"], 0.0)
    return h @ p["w3"] + p["b3"]


if __name__ == "__main__":
    key = jax.random.PRNGKey(0)
    k_x, k_p = jax.random.split(key)

    # Small, non-multiple-of-8 batch to exercise the cdiv/padding path.
    B = 100  # 768-dim sparse binary NNUE feature input (~10% density)
    x = (jax.random.uniform(k_x, (B, 768)) < 0.1).astype(jnp.float32)

    params = init_params(k_p)

    out = chess_nnue_forward(x, params)
    out = jax.block_until_ready(out)

    ref = reference_forward(x, params)
    assert out.shape == (B, 1)
    assert jnp.allclose(out, ref, atol=1e-5, rtol=1e-5), (out, ref)

    print("KERNEL_OK")
</pallas_src>

<mosaic_0001>
module attributes {stable_mosaic.version = 11 : i64} {
  func.func @nnue_kernel(%arg0: i32, %arg1: memref<104x768xbf16, #tpu.memory_space<vmem>>, %arg2: memref<768x8xf32, #tpu.memory_space<vmem>>, %arg3: memref<1x8xf32, #tpu.memory_space<vmem>>, %arg4: memref<8x8xf32, #tpu.memory_space<vmem>>, %arg5: memref<1x8xf32, #tpu.memory_space<vmem>>, %arg6: memref<8x8xf32, #tpu.memory_space<vmem>>, %arg7: memref<1x8xf32, #tpu.memory_space<vmem>>, %arg8: memref<8x1xf32, #tpu.memory_space<vmem>>, %arg9: memref<1x1xf32, #tpu.memory_space<vmem>>, %arg10: memref<104x1xf32, #tpu.memory_space<vmem>>) attributes {dimension_semantics = [#tpu.dimension_semantics<parallel>], iteration_bounds = array<i64: 1>, scalar_prefetch = 0 : i64, scratch_operands = 0 : i64, tpu.core_type = #tpu.core_type<tc>, window_params = [{transform_indices = @transform_0, window_bounds = array<i64: 104, 768>}, {pipeline_mode = #tpu.pipeline_mode<synchronous>, transform_indices = @transform_1, window_bounds = array<i64: 768, 8>}, {pipeline_mode = #tpu.pipeline_mode<synchronous>, transform_indices = @transform_2, window_bounds = array<i64: 1, 8>}, {pipeline_mode = #tpu.pipeline_mode<synchronous>, transform_indices = @transform_3, window_bounds = array<i64: 8, 8>}, {pipeline_mode = #tpu.pipeline_mode<synchronous>, transform_indices = @transform_4, window_bounds = array<i64: 1, 8>}, {pipeline_mode = #tpu.pipeline_mode<synchronous>, transform_indices = @transform_5, window_bounds = array<i64: 8, 8>}, {pipeline_mode = #tpu.pipeline_mode<synchronous>, transform_indices = @transform_6, window_bounds = array<i64: 1, 8>}, {pipeline_mode = #tpu.pipeline_mode<synchronous>, transform_indices = @transform_7, window_bounds = array<i64: 8, 1>}, {pipeline_mode = #tpu.pipeline_mode<synchronous>, transform_indices = @transform_8, window_bounds = array<i64: 1, 1>}, {transform_indices = @transform_9, window_bounds = array<i64: 104, 1>}]} {
    %c0 = arith.constant 0 : index
    %c0_0 = arith.constant 0 : index
    %0 = vector.load %arg1[%c0, %c0_0] : memref<104x768xbf16, #tpu.memory_space<vmem>>, vector<104x768xbf16>
    %1 = arith.extf %0 : vector<104x768xbf16> to vector<104x768xf32>
    %c0_1 = arith.constant 0 : index
    %c0_2 = arith.constant 0 : index
    %2 = vector.load %arg2[%c0_1, %c0_2] : memref<768x8xf32, #tpu.memory_space<vmem>>, vector<768x8xf32>
    %cst = arith.constant dense<0.000000e+00> : vector<104x8xf32>
    %3 = tpu.matmul %1, %2, %cst {dimension_numbers = #tpu.dot_dimension_numbers<[1], [0], [0], [1], [0, 0, 1, 1], [], []>} : vector<104x768xf32>, vector<768x8xf32>, vector<104x8xf32> -> vector<104x8xf32>
    %c0_3 = arith.constant 0 : index
    %c0_4 = arith.constant 0 : index
    %4 = vector.load %arg3[%c0_3, %c0_4] : memref<1x8xf32, #tpu.memory_space<vmem>>, vector<1x8xf32>
    %5 = vector.broadcast %4 : vector<1x8xf32> to vector<104x8xf32>
    %6 = arith.addf %3, %5 : vector<104x8xf32>
    %cst_5 = arith.constant 0.000000e+00 : f32
    %7 = vector.broadcast %cst_5 : f32 to vector<104x8xf32>
    %8 = arith.maximumf %6, %7 : vector<104x8xf32>
    %c0_6 = arith.constant 0 : index
    %c0_7 = arith.constant 0 : index
    %9 = vector.load %arg4[%c0_6, %c0_7] : memref<8x8xf32, #tpu.memory_space<vmem>>, vector<8x8xf32>
    %cst_8 = arith.constant dense<0.000000e+00> : vector<104x8xf32>
    %10 = tpu.matmul %8, %9, %cst_8 {dimension_numbers = #tpu.dot_dimension_numbers<[1], [0], [0], [1], [0, 0, 1, 1], [], []>} : vector<104x8xf32>, vector<8x8xf32>, vector<104x8xf32> -> vector<104x8xf32>
    %c0_9 = arith.constant 0 : index
    %c0_10 = arith.constant 0 : index
    %11 = vector.load %arg5[%c0_9, %c0_10] : memref<1x8xf32, #tpu.memory_space<vmem>>, vector<1x8xf32>
    %12 = vector.broadcast %11 : vector<1x8xf32> to vector<104x8xf32>
    %13 = arith.addf %10, %12 : vector<104x8xf32>
    %cst_11 = arith.constant 0.000000e+00 : f32
    %14 = vector.broadcast %cst_11 : f32 to vector<104x8xf32>
    %15 = arith.maximumf %13, %14 : vector<104x8xf32>
    %c0_12 = arith.constant 0 : index
    %c0_13 = arith.constant 0 : index
    %16 = vector.load %arg6[%c0_12, %c0_13] : memref<8x8xf32, #tpu.memory_space<vmem>>, vector<8x8xf32>
    %cst_14 = arith.constant dense<0.000000e+00> : vector<104x8xf32>
    %17 = tpu.matmul %15, %16, %cst_14 {dimension_numbers = #tpu.dot_dimension_numbers<[1], [0], [0], [1], [0, 0, 1, 1], [], []>} : vector<104x8xf32>, vector<8x8xf32>, vector<104x8xf32> -> vector<104x8xf32>
    %c0_15 = arith.constant 0 : index
    %c0_16 = arith.constant 0 : index
    %18 = vector.load %arg7[%c0_15, %c0_16] : memref<1x8xf32, #tpu.memory_space<vmem>>, vector<1x8xf32>
    %19 = vector.broadcast %18 : vector<1x8xf32> to vector<104x8xf32>
    %20 = arith.addf %17, %19 : vector<104x8xf32>
    %cst_17 = arith.constant 0.000000e+00 : f32
    %21 = vector.broadcast %cst_17 : f32 to vector<104x8xf32>
    %22 = arith.maximumf %20, %21 : vector<104x8xf32>
    %c0_18 = arith.constant 0 : index
    %c0_19 = arith.constant 0 : index
    %23 = vector.load %arg8[%c0_18, %c0_19] : memref<8x1xf32, #tpu.memory_space<vmem>>, vector<8x1xf32>
    %cst_20 = arith.constant dense<0.000000e+00> : vector<104x1xf32>
    %24 = tpu.matmul %22, %23, %cst_20 {dimension_numbers = #tpu.dot_dimension_numbers<[1], [0], [0], [1], [0, 0, 1, 1], [], []>} : vector<104x8xf32>, vector<8x1xf32>, vector<104x1xf32> -> vector<104x1xf32>
    %c0_21 = arith.constant 0 : index
    %c0_22 = arith.constant 0 : index
    %25 = vector.load %arg9[%c0_21, %c0_22] : memref<1x1xf32, #tpu.memory_space<vmem>>, vector<1x1xf32>
    %26 = vector.broadcast %25 : vector<1x1xf32> to vector<104x1xf32>
    %27 = arith.addf %24, %26 : vector<104x1xf32>
    %c0_23 = arith.constant 0 : index
    %c0_24 = arith.constant 0 : index
    %28 = vector.load %arg10[%c0_23, %c0_24] : memref<104x1xf32, #tpu.memory_space<vmem>>, vector<104x1xf32>
    tpu.vector_store %arg10[%c0_23, %c0_24], %27 {strides = array<i32>} : memref<104x1xf32, #tpu.memory_space<vmem>>, vector<104x1xf32>,
    return
  }
  func.func @transform_0(%arg0: i32) -> (i32, i32) {
    %c0_i32 = arith.constant 0 : i32
    %c0_i32_0 = arith.constant 0 : i32
    return %arg0, %c0_i32 : i32, i32
  }
  func.func @transform_1(%arg0: i32) -> (i32, i32) {
    %c0_i32 = arith.constant 0 : i32
    %c0_i32_0 = arith.constant 0 : i32
    %c0_i32_1 = arith.constant 0 : i32
    return %c0_i32, %c0_i32_0 : i32, i32
  }
  func.func @transform_2(%arg0: i32) -> (i32, i32) {
    %c0_i32 = arith.constant 0 : i32
    %c0_i32_0 = arith.constant 0 : i32
    %c0_i32_1 = arith.constant 0 : i32
    return %c0_i32, %c0_i32_0 : i32, i32
  }
  func.func @transform_3(%arg0: i32) -> (i32, i32) {
    %c0_i32 = arith.constant 0 : i32
    %c0_i32_0 = arith.constant 0 : i32
    %c0_i32_1 = arith.constant 0 : i32
    return %c0_i32, %c0_i32_0 : i32, i32
  }
  func.func @transform_4(%arg0: i32) -> (i32, i32) {
    %c0_i32 = arith.constant 0 : i32
    %c0_i32_0 = arith.constant 0 : i32
    %c0_i32_1 = arith.constant 0 : i32
    return %c0_i32, %c0_i32_0 : i32, i32
  }
  func.func @transform_5(%arg0: i32) -> (i32, i32) {
    %c0_i32 = arith.constant 0 : i32
    %c0_i32_0 = arith.constant 0 : i32
    %c0_i32_1 = arith.constant 0 : i32
    return %c0_i32, %c0_i32_0 : i32, i32
  }
  func.func @transform_6(%arg0: i32) -> (i32, i32) {
    %c0_i32 = arith.constant 0 : i32
    %c0_i32_0 = arith.constant 0 : i32
    %c0_i32_1 = arith.constant 0 : i32
    return %c0_i32, %c0_i32_0 : i32, i32
  }
  func.func @transform_7(%arg0: i32) -> (i32, i32) {
    %c0_i32 = arith.constant 0 : i32
    %c0_i32_0 = arith.constant 0 : i32
    %c0_i32_1 = arith.constant 0 : i32
    return %c0_i32, %c0_i32_0 : i32, i32
  }
  func.func @transform_8(%arg0: i32) -> (i32, i32) {
    %c0_i32 = arith.constant 0 : i32
    %c0_i32_0 = arith.constant 0 : i32
    %c0_i32_1 = arith.constant 0 : i32
    return %c0_i32, %c0_i32_0 : i32, i32
  }
  func.func @transform_9(%arg0: i32) -> (i32, i32) {
    %c0_i32 = arith.constant 0 : i32
    %c0_i32_0 = arith.constant 0 : i32
    return %arg0, %c0_i32 : i32, i32
  }
}

</mosaic_0001>

<llo_original>
// kernel: tpu_custom_call.1
$region0: #{tpu_custom_call.1}
  #allocation0 [shape = 'u32[]', space=smem, size = 0x4, offset = 0x4, fixed_abs, tag = 'smem constant byte address 0x4 - core index']
  #allocation1 [shape = 'u32[144,128]{1,0:T(1,128)}', space=vmem, size = 0x12000, scoped, tag = 'internal scratch']
  #allocation2 [shape = 'f32[1,1]{1,0:T(1,128)S(1)}', space=vmem, size = 0x200, scoped, tag = 'scoped memory for tpu_custom_call.1']
  %s0 = inlined_call_operand.vmem [shape: bf16[104,768], index: 0, kind: input, shape index: {}]
  %s1 = inlined_call_operand.vmem [shape: f32[768,8], index: 1, kind: input, shape index: {}]
  %s2 = inlined_call_operand.vmem [shape: f32[1,8], index: 2, kind: input, shape index: {}]
  %s3 = inlined_call_operand.vmem [shape: f32[8,8], index: 3, kind: input, shape index: {}]
  %s4 = inlined_call_operand.vmem [shape: f32[1,8], index: 4, kind: input, shape index: {}]
  %s5 = inlined_call_operand.vmem [shape: f32[8,8], index: 5, kind: input, shape index: {}]
  %s6 = inlined_call_operand.vmem [shape: f32[1,8], index: 6, kind: input, shape index: {}]
  %s7 = inlined_call_operand.vmem [shape: f32[8,1], index: 7, kind: input, shape index: {}]
  %s8 = inlined_call_operand.<no memory space> [shape: f32[1,1], index: 8, kind: input, shape index: {}]
  %s9 = inlined_call_operand.vmem [shape: f32[104,1], index: 9, kind: output, shape index: {}]
  %s10 = sld [smem:[#allocation0]]
  $region46: #{tpu_custom_call.1} parent=0
    _
  %s12 = ssub.s32 1, %s10
  %s13 = scalar_select 0, %s12, %s10
  %v14 = vstv %s8
  %15 = vst [vmem:[#allocation2] sm:$0x1] %v14
  // Predicated region
  $region2: #{tpu_custom_call.1} parent=0 // pred_check
    _
  $region3: #{tpu_custom_call.1} parent=0 // pred_check_branch
    %17 = sbr.rel (0) target = $region5
  $region4: #{tpu_custom_call.1} parent=0 // pred_region
    _
  $region5: #{tpu_custom_call.1} parent=0 // pred_fallthru
    _
  // Predicated region
  $region6: #{tpu_custom_call.1} parent=0 // pred_check
    _
  $region7: #{tpu_custom_call.1} parent=0 // pred_check_branch
    %19 = sbr.rel (0) target = $region9
  $region8: #{tpu_custom_call.1} parent=0 // pred_region
    _
  $region9: #{tpu_custom_call.1} parent=0 // pred_fallthru
    _
  // Predicated region
  $region10: #{tpu_custom_call.1} parent=0 // pred_check
    _
  $region11: #{tpu_custom_call.1} parent=0 // pred_check_branch
    %21 = sbr.rel (0) target = $region13
  $region12: #{tpu_custom_call.1} parent=0 // pred_region
    _
  $region13: #{tpu_custom_call.1} parent=0 // pred_fallthru
    _
  // Predicated region
  $region14: #{tpu_custom_call.1} parent=0 // pred_check
    _
  $region15: #{tpu_custom_call.1} parent=0 // pred_check_branch
    %23 = sbr.rel (0) target = $region17
  $region16: #{tpu_custom_call.1} parent=0 // pred_region
    _
  $region17: #{tpu_custom_call.1} parent=0 // pred_fallthru
    _
  // Predicated region
  $region18: #{tpu_custom_call.1} parent=0 // pred_check
    _
  $region19: #{tpu_custom_call.1} parent=0 // pred_check_branch
    %25 = sbr.rel (0) target = $region21
  $region20: #{tpu_custom_call.1} parent=0 // pred_region
    _
  $region21: #{tpu_custom_call.1} parent=0 // pred_fallthru
    _
  // Predicated region
  $region22: #{tpu_custom_call.1} parent=0 // pred_check
    _
  $region23: #{tpu_custom_call.1} parent=0 // pred_check_branch
    %27 = sbr.rel (0) target = $region25
  $region24: #{tpu_custom_call.1} parent=0 // pred_region
    _
  $region25: #{tpu_custom_call.1} parent=0 // pred_fallthru
    _
  // Predicated region
  $region26: #{tpu_custom_call.1} parent=0 // pred_check
    _
  $region27: #{tpu_custom_call.1} parent=0 // pred_check_branch
    %29 = sbr.rel (0) target = $region29
  $region28: #{tpu_custom_call.1} parent=0 // pred_region
    _
  $region29: #{tpu_custom_call.1} parent=0 // pred_fallthru
    _
  // Predicated region
  $region30: #{tpu_custom_call.1} parent=0 // pred_check
    _
  $region31: #{tpu_custom_call.1} parent=0 // pred_check_branch
    %31 = sbr.rel (0) target = $region33
  $region32: #{tpu_custom_call.1} parent=0 // pred_region
    _
  $region33: #{tpu_custom_call.1} parent=0 // pred_fallthru
    _
  // Predicated region
  $region34: #{tpu_custom_call.1} parent=0 // pred_check
    _
  $region35: #{tpu_custom_call.1} parent=0 // pred_check_branch
    %33 = sbr.rel (0) target = $region37
  $region36: #{tpu_custom_call.1} parent=0 // pred_region
    _
  $region37: #{tpu_custom_call.1} parent=0 // pred_fallthru
    _
  %v34 = vld [vmem:[%s0] sm:$0xff]
  %v35 = vld [vmem:[%s0 + $0x8] sm:$0xff]
  %v36 = vld [vmem:[%s0 + $0x10] sm:$0xff]
  %v37 = vld [vmem:[%s0 + $0x18] sm:$0xff]
  %v38 = vld [vmem:[%s0 + $0x20] sm:$0xff]
  %v39 = vld [vmem:[%s0 + $0x28] sm:$0xff]
  %v40 = vld [vmem:[%s0 + $0x30] sm:$0xff]
  %v41 = vld [vmem:[%s0 + $0x38] sm:$0xff]
  %v42 = vld [vmem:[%s0 + $0x40] sm:$0xff]
  %v43 = vld [vmem:[%s0 + $0x48] sm:$0xff]
  %v44 = vld [vmem:[%s0 + $0x50] sm:$0xff]
  %v45 = vld [vmem:[%s0 + $0x58] sm:$0xff]
  %v46 = vld [vmem:[%s0 + $0x60] sm:$0xff]
  %v47 = vld [vmem:[%s0 + $0x68] sm:$0xff]
  %v48 = vld [vmem:[%s0 + $0x70] sm:$0xff]
  %v49 = vld [vmem:[%s0 + $0x78] sm:$0xff]
  %v50 = vld [vmem:[%s0 + $0x80] sm:$0xff]
  %v51 = vld [vmem:[%s0 + $0x88] sm:$0xff]
  %v52 = vld [vmem:[%s0 + $0x90] sm:$0xff]
  %v53 = vld [vmem:[%s0 + $0x98] sm:$0xff]
  %v54 = vld [vmem:[%s0 + $0xa0] sm:$0xff]
  %v55 = vld [vmem:[%s0 + $0xa8] sm:$0xff]
  %v56 = vld [vmem:[%s0 + $0xb0] sm:$0xff]
  %v57 = vld [vmem:[%s0 + $0xb8] sm:$0xff]
  %v58 = vld [vmem:[%s0 + $0xc0] sm:$0xff]
  %v59 = vld [vmem:[%s0 + $0xc8] sm:$0xff]
  %v60 = vld [vmem:[%s0 + $0xd0] sm:$0xff]
  %v61 = vld [vmem:[%s0 + $0xd8] sm:$0xff]
  %v62 = vld [vmem:[%s0 + $0xe0] sm:$0xff]
  %v63 = vld [vmem:[%s0 + $0xe8] sm:$0xff]
  %v64 = vld [vmem:[%s0 + $0xf0] sm:$0xff]
  %v65 = vld [vmem:[%s0 + $0xf8] sm:$0xff]
  %v66 = vld [vmem:[%s0 + $0x100] sm:$0xff]
  %v67 = vld [vmem:[%s0 + $0x108] sm:$0xff]
  %v68 = vld [vmem:[%s0 + $0x110] sm:$0xff]
  %v69 = vld [vmem:[%s0 + $0x118] sm:$0xff]
  %v70 = vld [vmem:[%s0 + $0x120] sm:$0xff]
  %v71 = vld [vmem:[%s0 + $0x128] sm:$0xff]
  %v72 = vld [vmem:[%s0 + $0x130] sm:$0xff]
  %v73 = vunpack.c.l.bf16 %v34
  %v74 = vunpack.c.h.bf16 %v34
  %v75 = vunpack.c.l.bf16 %v35
  %v76 = vunpack.c.h.bf16 %v35
  %v77 = vunpack.c.l.bf16 %v36
  %v78 = vunpack.c.h.bf16 %v36
  %v79 = vunpack.c.l.bf16 %v37
  %v80 = vunpack.c.h.bf16 %v37
  %v81 = vunpack.c.l.bf16 %v38
  %v82 = vunpack.c.h.bf16 %v38
  %v83 = vunpack.c.l.bf16 %v39
  %v84 = vunpack.c.h.bf16 %v39
  %v85 = vunpack.c.l.bf16 %v40
  %v86 = vunpack.c.h.bf16 %v40
  %v87 = vunpack.c.l.bf16 %v41
  %v88 = vunpack.c.h.bf16 %v41
  %v89 = vunpack.c.l.bf16 %v42
  %v90 = vunpack.c.h.bf16 %v42
  %v91 = vunpack.c.l.bf16 %v43
  %v92 = vunpack.c.h.bf16 %v43
  %v93 = vunpack.c.l.bf16 %v44
  %v94 = vunpack.c.h.bf16 %v44
  %v95 = vunpack.c.l.bf16 %v45
  %v96 = vunpack.c.h.bf16 %v45
  %v97 = vunpack.c.l.bf16 %v46
  %v98 = vunpack.c.h.bf16 %v46
  %v99 = vunpack.c.l.bf16 %v47
  %v100 = vunpack.c.h.bf16 %v47
  %v101 = vunpack.c.l.bf16 %v48
  %v102 = vunpack.c.h.bf16 %v48
  %v103 = vunpack.c.l.bf16 %v49
  %v104 = vunpack.c.h.bf16 %v49
  %v105 = vunpack.c.l.bf16 %v50
  %v106 = vunpack.c.h.bf16 %v50
  %v107 = vunpack.c.l.bf16 %v51
  %v108 = vunpack.c.h.bf16 %v51
  %v109 = vunpack.c.l.bf16 %v52
  %v110 = vunpack.c.h.bf16 %v52
  %v111 = vunpack.c.l.bf16 %v53
  %v112 = vunpack.c.h.bf16 %v53
  %v113 = vunpack.c.l.bf16 %v54
  %v114 = vunpack.c.h.bf16 %v54
  %v115 = vunpack.c.l.bf16 %v55
  %v116 = vunpack.c.h.bf16 %v55
  %v117 = vunpack.c.l.bf16 %v56
  %v118 = vunpack.c.h.bf16 %v56
  %v119 = vunpack.c.l.bf16 %v57
  %v120 = vunpack.c.h.bf16 %v57
  %v121 = vunpack.c.l.bf16 %v58
  %v122 = vunpack.c.h.bf16 %v58
  %v123 = vunpack.c.l.bf16 %v59
  %v124 = vunpack.c.h.bf16 %v59
  %v125 = vunpack.c.l.bf16 %v60
  %v126 = vunpack.c.h.bf16 %v60
  %v127 = vunpack.c.l.bf16 %v61
  %v128 = vunpack.c.h.bf16 %v61
  %v129 = vunpack.c.l.bf16 %v62
  %v130 = vunpack.c.h.bf16 %v62
  %v131 = vunpack.c.l.bf16 %v63
  %v132 = vunpack.c.h.bf16 %v63
  %v133 = vunpack.c.l.bf16 %v64
  %v134 = vunpack.c.h.bf16 %v64
  %v135 = vunpack.c.l.bf16 %v65
  %v136 = vunpack.c.h.bf16 %v65
  %v137 = vunpack.c.l.bf16 %v66
  %v138 = vunpack.c.h.bf16 %v66
  %v139 = vunpack.c.l.bf16 %v67
  %v140 = vunpack.c.h.bf16 %v67
  %v141 = vunpack.c.l.bf16 %v68
  %v142 = vunpack.c.h.bf16 %v68
  %v143 = vunpack.c.l.bf16 %v69
  %v144 = vunpack.c.h.bf16 %v69
  %v145 = vunpack.c.l.bf16 %v70
  %v146 = vunpack.c.h.bf16 %v70
  %v147 = vunpack.c.l.bf16 %v71
  %v148 = vunpack.c.h.bf16 %v71
  %v149 = vunpack.c.l.bf16 %v72
  %v150 = vunpack.c.h.bf16 %v72
  %v151 = vld [vmem:[%s1] sm:$0xff]
  %v152 = vld [vmem:[%s1 + $0x8] sm:$0xff]
  %v153 = vld [vmem:[%s1 + $0x10] sm:$0xff]
  %v154 = vld [vmem:[%s1 + $0x18] sm:$0xff]
  %v155 = vld [vmem:[%s1 + $0x20] sm:$0xff]
  %v156 = vld [vmem:[%s1 + $0x28] sm:$0xff]
  %v157 = vld [vmem:[%s1 + $0x30] sm:$0xff]
  %v158 = vld [vmem:[%s1 + $0x38] sm:$0xff]
  %v159 = vld [vmem:[%s1 + $0x40] sm:$0xff]
  %v160 = vld [vmem:[%s1 + $0x48] sm:$0xff]
  %v161 = vld [vmem:[%s1 + $0x50] sm:$0xff]
  %v162 = vld [vmem:[%s1 + $0x58] sm:$0xff]
  %v163 = vld [vmem:[%s1 + $0x60] sm:$0xff]
  %v164 = vld [vmem:[%s1 + $0x68] sm:$0xff]
  %v165 = vld [vmem:[%s1 + $0x70] sm:$0xff]
  %v166 = vld [vmem:[%s1 + $0x78] sm:$0xff]
  %v167 = vld [vmem:[%s1 + $0x80] sm:$0xff]
  %v168 = vld [vmem:[%s1 + $0x88] sm:$0xff]
  %v169 = vld [vmem:[%s1 + $0x90] sm:$0xff]
  %v170 = vld [vmem:[%s1 + $0x98] sm:$0xff]
  %v171 = vld [vmem:[%s1 + $0xa0] sm:$0xff]
  %v172 = vld [vmem:[%s1 + $0xa8] sm:$0xff]
  %v173 = vld [vmem:[%s1 + $0xb0] sm:$0xff]
  %v174 = vld [vmem:[%s1 + $0xb8] sm:$0xff]
  %v175 = vld [vmem:[%s1 + $0xc0] sm:$0xff]
  %v176 = vld [vmem:[%s1 + $0xc8] sm:$0xff]
  %v177 = vld [vmem:[%s1 + $0xd0] sm:$0xff]
  %v178 = vld [vmem:[%s1 + $0xd8] sm:$0xff]
  %v179 = vld [vmem:[%s1 + $0xe0] sm:$0xff]
  %v180 = vld [vmem:[%s1 + $0xe8] sm:$0xff]
  %v181 = vld [vmem:[%s1 + $0xf0] sm:$0xff]
  %v182 = vld [vmem:[%s1 + $0xf8] sm:$0xff]
  %v183 = vld [vmem:[%s1 + $0x100] sm:$0xff]
  %v184 = vld [vmem:[%s1 + $0x108] sm:$0xff]
  %v185 = vld [vmem:[%s1 + $0x110] sm:$0xff]
  %v186 = vld [vmem:[%s1 + $0x118] sm:$0xff]
  %v187 = vld [vmem:[%s1 + $0x120] sm:$0xff]
  %v188 = vld [vmem:[%s1 + $0x128] sm:$0xff]
  %v189 = vld [vmem:[%s1 + $0x130] sm:$0xff]
  %v190 = vld [vmem:[%s1 + $0x138] sm:$0xff]
  %v191 = vld [vmem:[%s1 + $0x140] sm:$0xff]
  %v192 = vld [vmem:[%s1 + $0x148] sm:$0xff]
  %v193 = vld [vmem:[%s1 + $0x150] sm:$0xff]
  %v194 = vld [vmem:[%s1 + $0x158] sm:$0xff]
  %v195 = vld [vmem:[%s1 + $0x160] sm:$0xff]
  %v196 = vld [vmem:[%s1 + $0x168] sm:$0xff]
  %v197 = vld [vmem:[%s1 + $0x170] sm:$0xff]
  %v198 = vld [vmem:[%s1 + $0x178] sm:$0xff]
  %v199 = vld [vmem:[%s1 + $0x180] sm:$0xff]
  %v200 = vld [vmem:[%s1 + $0x188] sm:$0xff]
  %v201 = vld [vmem:[%s1 + $0x190] sm:$0xff]
  %v202 = vld [vmem:[%s1 + $0x198] sm:$0xff]
  %v203 = vld [vmem:[%s1 + $0x1a0] sm:$0xff]
  %v204 = vld [vmem:[%s1 + $0x1a8] sm:$0xff]
  %v205 = vld [vmem:[%s1 + $0x1b0] sm:$0xff]
  %v206 = vld [vmem:[%s1 + $0x1b8] sm:$0xff]
  %v207 = vld [vmem:[%s1 + $0x1c0] sm:$0xff]
  %v208 = vld [vmem:[%s1 + $0x1c8] sm:$0xff]
  %v209 = vld [vmem:[%s1 + $0x1d0] sm:$0xff]
  %v210 = vld [vmem:[%s1 + $0x1d8] sm:$0xff]
  %v211 = vld [vmem:[%s1 + $0x1e0] sm:$0xff]
  %v212 = vld [vmem:[%s1 + $0x1e8] sm:$0xff]
  %v213 = vld [vmem:[%s1 + $0x1f0] sm:$0xff]
  %v214 = vld [vmem:[%s1 + $0x1f8] sm:$0xff]
  %v215 = vld [vmem:[%s1 + $0x200] sm:$0xff]
  %v216 = vld [vmem:[%s1 + $0x208] sm:$0xff]
  %v217 = vld [vmem:[%s1 + $0x210] sm:$0xff]
  %v218 = vld [vmem:[%s1 + $0x218] sm:$0xff]
  %v219 = vld [vmem:[%s1 + $0x220] sm:$0xff]
  %v220 = vld [vmem:[%s1 + $0x228] sm:$0xff]
  %v221 = vld [vmem:[%s1 + $0x230] sm:$0xff]
  %v222 = vld [vmem:[%s1 + $0x238] sm:$0xff]
  %v223 = vld [vmem:[%s1 + $0x240] sm:$0xff]
  %v224 = vld [vmem:[%s1 + $0x248] sm:$0xff]
  %v225 = vld [vmem:[%s1 + $0x250] sm:$0xff]
  %v226 = vld [vmem:[%s1 + $0x258] sm:$0xff]
  %v227 = vld [vmem:[%s1 + $0x260] sm:$0xff]
  %v228 = vld [vmem:[%s1 + $0x268] sm:$0xff]
  %v229 = vld [vmem:[%s1 + $0x270] sm:$0xff]
  %v230 = vld [vmem:[%s1 + $0x278] sm:$0xff]
  %v231 = vld [vmem:[%s1 + $0x280] sm:$0xff]
  %v232 = vld [vmem:[%s1 + $0x288] sm:$0xff]
  %v233 = vld [vmem:[%s1 + $0x290] sm:$0xff]
  %v234 = vld [vmem:[%s1 + $0x298] sm:$0xff]
  %v235 = vld [vmem:[%s1 + $0x2a0] sm:$0xff]
  %v236 = vld [vmem:[%s1 + $0x2a8] sm:$0xff]
  %v237 = vld [vmem:[%s1 + $0x2b0] sm:$0xff]
  %v238 = vld [vmem:[%s1 + $0x2b8] sm:$0xff]
  %v239 = vld [vmem:[%s1 + $0x2c0] sm:$0xff]
  %v240 = vld [vmem:[%s1 + $0x2c8] sm:$0xff]
  %v241 = vld [vmem:[%s1 + $0x2d0] sm:$0xff]
  %v242 = vld [vmem:[%s1 + $0x2d8] sm:$0xff]
  %v243 = vld [vmem:[%s1 + $0x2e0] sm:$0xff]
  %v244 = vld [vmem:[%s1 + $0x2e8] sm:$0xff]
  %v245 = vld [vmem:[%s1 + $0x2f0] sm:$0xff]
  %v246 = vld [vmem:[%s1 + $0x2f8] sm:$0xff]
  %v247 = vld [vmem:[%s2] sm:$0x1]
  %v249 = vlaneseq
  %v250 = vshrl.u32 %v249, 7
  %v251 = vsub.s32 0, %v250
  %v252 = vrot.slane %v247, %v251
  %254 = vmatprep.subr.mxu0 0.0
  %255 = vmatpush1.msra.mxu0 %v151
  %256 = vmatprep.subr.mxu0 0.0
  %257 = vmatpush1.msra.mxu0 %v152
  %258 = vmatprep.subr.mxu0 0.0
  %259 = vmatpush1.msra.mxu0 %v153
  %260 = vmatprep.subr.mxu0 0.0
  %261 = vmatpush1.msra.mxu0 %v154
  %262 = vmatprep.subr.mxu0 0.0
  %263 = vmatpush1.msra.mxu0 %v155
  %264 = vmatprep.subr.mxu0 0.0
  %265 = vmatpush1.msra.mxu0 %v156
  %266 = vmatprep.subr.mxu0 0.0
  %267 = vmatpush1.msra.mxu0 %v157
  %268 = vmatprep.subr.mxu0 0.0
  %269 = vmatpush1.msra.mxu0 %v158
  %270 = vmatprep.subr.mxu0 0.0
  %271 = vmatpush1.msra.mxu0 %v159
  %272 = vmatprep.subr.mxu0 0.0
  %273 = vmatpush1.msra.mxu0 %v160
  %274 = vmatprep.subr.mxu0 0.0
  %275 = vmatpush1.msra.mxu0 %v161
  %276 = vmatprep.subr.mxu0 0.0
  %277 = vmatpush1.msra.mxu0 %v162
  %278 = vmatprep.subr.mxu0 0.0
  %279 = vmatpush1.msra.mxu0 %v163
  %280 = vmatprep.subr.mxu0 0.0
  %281 = vmatpush1.msra.mxu0 %v164
  %282 = vmatprep.subr.mxu0 0.0
  %283 = vmatpush1.msra.mxu0 %v165
  %284 = vmatprep.subr.mxu0 0.0
  %285 = vmatpush1.msra.mxu0 %v166
  %286 = vmatprep.subr.mxu0 0.0
  %287 = vmatpush1.msra.mxu0 %v167
  %288 = vmatprep.subr.mxu0 0.0
  %289 = vmatpush1.msra.mxu0 %v168
  %290 = vmatprep.subr.mxu0 0.0
  %291 = vmatpush1.msra.mxu0 %v169
  %292 = vmatprep.subr.mxu0 0.0
  %293 = vmatpush1.msra.mxu0 %v170
  %294 = vmatprep.subr.mxu0 0.0
  %295 = vmatpush1.msra.mxu0 %v171
  %296 = vmatprep.subr.mxu0 0.0
  %297 = vmatpush1.msra.mxu0 %v172
  %298 = vmatprep.subr.mxu0 0.0
  %299 = vmatpush1.msra.mxu0 %v173
  %300 = vmatprep.subr.mxu0 0.0
  %301 = vmatpush1.msra.mxu0 %v174
  %302 = vmatprep.subr.mxu0 0.0
  %303 = vmatpush1.msra.mxu0 %v175
  %304 = vmatprep.subr.mxu0 0.0
  %305 = vmatpush1.msra.mxu0 %v176
  %306 = vmatprep.subr.mxu0 0.0
  %307 = vmatpush1.msra.mxu0 %v177
  %308 = vmatprep.subr.mxu0 0.0
  %309 = vmatpush1.msra.mxu0 %v178
  %310 = vmatprep.subr.mxu0 0.0
  %311 = vmatpush1.msra.mxu0 %v179
  %312 = vmatprep.subr.mxu0 0.0
  %313 = vmatpush1.msra.mxu0 %v180
  %314 = vmatprep.subr.mxu0 0.0
  %315 = vmatpush1.msra.mxu0 %v181
  %316 = vmatprep.subr.mxu0 0.0
  %317 = vmatpush1.msra.mxu0 %v182
  %318 = vmatprep.mubr.f32.mxu0 %v74
  %319 = vmatmul.mubr.f32.gmra.mrb[0].mxu0 %v73
  %v320 = vpop.f32.mrb[0].mxu0
  %v321 = vadd.f32 %v252, %v320
  %v322 = vpop.f32.mrb[0].mxu0
  %323 = vmatprep.mubr.f32.mxu0 %v80
  %324 = vmatmul.mubr.f32.gmra.mrb[0].mxu0 %v79
  %v325 = vpop.f32.mrb[0].mxu0
  %v326 = vadd.f32 %v252, %v325
  %v327 = vpop.f32.mrb[0].mxu0
  %328 = vmatprep.mubr.f32.mxu0 %v86
  %329 = vmatmul.mubr.f32.gmra.mrb[0].mxu0 %v85
  %v330 = vpop.f32.mrb[0].mxu0
  %v331 = vadd.f32 %v252, %v330
  %v332 = vpop.f32.mrb[0].mxu0
  %333 = vmatprep.mubr.f32.mxu0 %v92
  %334 = vmatmul.mubr.f32.gmra.mrb[0].mxu0 %v91
  %v335 = vpop.f32.mrb[0].mxu0
  %v336 = vadd.f32 %v252, %v335
  %v337 = vpop.f32.mrb[0].mxu0
  %338 = vmatprep.mubr.f32.mxu0 %v98
  %339 = vmatmul.mubr.f32.gmra.mrb[0].mxu0 %v97
  %v340 = vpop.f32.mrb[0].mxu0
  %v341 = vadd.f32 %v252, %v340
  %v342 = vpop.f32.mrb[0].mxu0
  %343 = vmatprep.mubr.f32.mxu0 %v104
  %344 = vmatmul.mubr.f32.gmra.mrb[0].mxu0 %v103
  %v345 = vpop.f32.mrb[0].mxu0
  %v346 = vadd.f32 %v252, %v345
  %v347 = vpop.f32.mrb[0].mxu0
  %348 = vmatprep.mubr.f32.mxu0 %v110
  %349 = vmatmul.mubr.f32.gmra.mrb[0].mxu0 %v109
  %v350 = vpop.f32.mrb[0].mxu0
  %v351 = vadd.f32 %v252, %v350
  %v352 = vpop.f32.mrb[0].mxu0
  %353 = vmatprep.mubr.f32.mxu0 %v116
  %354 = vmatmul.mubr.f32.gmra.mrb[0].mxu0 %v115
  %v355 = vpop.f32.mrb[0].mxu0
  %v356 = vadd.f32 %v252, %v355
  %v357 = vpop.f32.mrb[0].mxu0
  %358 = vmatprep.mubr.f32.mxu0 %v122
  %359 = vmatmul.mubr.f32.gmra.mrb[0].mxu0 %v121
  %v360 = vpop.f32.mrb[0].mxu0
  %v361 = vadd.f32 %v252, %v360
  %v362 = vpop.f32.mrb[0].mxu0
  %363 = vmatprep.mubr.f32.mxu0 %v128
  %364 = vmatmul.mubr.f32.gmra.mrb[0].mxu0 %v127
  %v365 = vpop.f32.mrb[0].mxu0
  %v366 = vadd.f32 %v252, %v365
  %v367 = vpop.f32.mrb[0].mxu0
  %368 = vmatprep.mubr.f32.mxu0 %v134
  %369 = vmatmul.mubr.f32.gmra.mrb[0].mxu0 %v133
  %v370 = vpop.f32.mrb[0].mxu0
  %v371 = vadd.f32 %v252, %v370
  %v372 = vpop.f32.mrb[0].mxu0
  %373 = vmatprep.mubr.f32.mxu0 %v140
  %374 = vmatmul.mubr.f32.gmra.mrb[0].mxu0 %v139
  %v375 = vpop.f32.mrb[0].mxu0
  %v376 = vadd.f32 %v252, %v375
  %v377 = vpop.f32.mrb[0].mxu0
  %378 = vmatprep.mubr.f32.mxu0 %v146
  %379 = vmatmul.mubr.f32.gmra.mrb[0].mxu0 %v145
  %v380 = vpop.f32.mrb[0].mxu0
  %v381 = vadd.f32 %v252, %v380
  %v382 = vpop.f32.mrb[0].mxu0
  %383 = vdwg.mxu0
  %384 = vmatprep.subr.mxu0 0.0
  %385 = vmatpush1.msra.mxu0 %v183
  %386 = vmatprep.subr.mxu0 0.0
  %387 = vmatpush1.msra.mxu0 %v184
  %388 = vmatprep.subr.mxu0 0.0
  %389 = vmatpush1.msra.mxu0 %v185
  %390 = vmatprep.subr.mxu0 0.0
  %391 = vmatpush1.msra.mxu0 %v186
  %392 = vmatprep.subr.mxu0 0.0
  %393 = vmatpush1.msra.mxu0 %v187
  %394 = vmatprep.subr.mxu0 0.0
  %395 = vmatpush1.msra.mxu0 %v188
  %396 = vmatprep.subr.mxu0 0.0
  %397 = vmatpush1.msra.mxu0 %v189
  %398 = vmatprep.subr.mxu0 0.0
  %399 = vmatpush1.msra.mxu0 %v190
  %400 = vmatprep.subr.mxu0 0.0
  %401 = vmatpush1.msra.mxu0 %v191
  %402 = vmatprep.subr.mxu0 0.0
  %403 = vmatpush1.msra.mxu0 %v192
  %404 = vmatprep.subr.mxu0 0.0
  %405 = vmatpush1.msra.mxu0 %v193
  %406 = vmatprep.subr.mxu0 0.0
  %407 = vmatpush1.msra.mxu0 %v194
  %408 = vmatprep.subr.mxu0 0.0
  %409 = vmatpush1.msra.mxu0 %v195
  %410 = vmatprep.subr.mxu0 0.0
  %411 = vmatpush1.msra.mxu0 %v196
  %412 = vmatprep.subr.mxu0 0.0
  %413 = vmatpush1.msra.mxu0 %v197
  %414 = vmatprep.subr.mxu0 0.0
  %415 = vmatpush1.msra.mxu0 %v198
  %416 = vmatprep.subr.mxu0 0.0
  %417 = vmatpush1.msra.mxu0 %v199
  %418 = vmatprep.subr.mxu0 0.0
  %419 = vmatpush1.msra.mxu0 %v200
  %420 = vmatprep.subr.mxu0 0.0
  %421 = vmatpush1.msra.mxu0 %v201
  %422 = vmatprep.subr.mxu0 0.0
  %423 = vmatpush1.msra.mxu0 %v202
  %424 = vmatprep.subr.mxu0 0.0
  %425 = vmatpush1.msra.mxu0 %v203
  %426 = vmatprep.subr.mxu0 0.0
  %427 = vmatpush1.msra.mxu0 %v204
  %428 = vmatprep.subr.mxu0 0.0
  %429 = vmatpush1.msra.mxu0 %v205
  %430 = vmatprep.subr.mxu0 0.0
  %431 = vmatpush1.msra.mxu0 %v206
  %432 = vmatprep.subr.mxu0 0.0
  %433 = vmatpush1.msra.mxu0 %v207
  %434 = vmatprep.subr.mxu0 0.0
  %435 = vmatpush1.msra.mxu0 %v208
  %436 = vmatprep.subr.mxu0 0.0
  %437 = vmatpush1.msra.mxu0 %v209
  %438 = vmatprep.subr.mxu0 0.0
  %439 = vmatpush1.msra.mxu0 %v210
  %440 = vmatprep.subr.mxu0 0.0
  %441 = vmatpush1.msra.mxu0 %v211
  %442 = vmatprep.subr.mxu0 0.0
  %443 = vmatpush1.msra.mxu0 %v212
  %444 = vmatprep.subr.mxu0 0.0
  %445 = vmatpush1.msra.mxu0 %v213
  %446 = vmatprep.subr.mxu0 0.0
  %447 = vmatpush1.msra.mxu0 %v214
  %448 = vmatprep.mubr.f32.mxu0 %v76
  %449 = vmatmul.mubr.f32.gmra.mrb[0].mxu0 %v75
  %v450 = vpop.f32.mrb[0].mxu0
  %v451 = vadd.f32 %v321, %v450
  %v452 = vpop.f32.mrb[0].mxu0
  %453 = vmatprep.mubr.f32.mxu0 %v82
  %454 = vmatmul.mubr.f32.gmra.mrb[0].mxu0 %v81
  %v455 = vpop.f32.mrb[0].mxu0
  %v456 = vadd.f32 %v326, %v455
  %v457 = vpop.f32.mrb[0].mxu0
  %458 = vmatprep.mubr.f32.mxu0 %v88
  %459 = vmatmul.mubr.f32.gmra.mrb[0].mxu0 %v87
  %v460 = vpop.f32.mrb[0].mxu0
  %v461 = vadd.f32 %v331, %v460
  %v462 = vpop.f32.mrb[0].mxu0
  %463 = vmatprep.mubr.f32.mxu0 %v94
  %464 = vmatmul.mubr.f32.gmra.mrb[0].mxu0 %v93
  %v465 = vpop.f32.mrb[0].mxu0
  %v466 = vadd.f32 %v336, %v465
  %v467 = vpop.f32.mrb[0].mxu0
  %468 = vmatprep.mubr.f32.mxu0 %v100
  %469 = vmatmul.mubr.f32.gmra.mrb[0].mxu0 %v99
  %v470 = vpop.f32.mrb[0].mxu0
  %v471 = vadd.f32 %v341, %v470
  %v472 = vpop.f32.mrb[0].mxu0
  %473 = vmatprep.mubr.f32.mxu0 %v106
  %474 = vmatmul.mubr.f32.gmra.mrb[0].mxu0 %v105
  %v475 = vpop.f32.mrb[0].mxu0
  %v476 = vadd.f32 %v346, %v475
  %v477 = vpop.f32.mrb[0].mxu0
  %478 = vmatprep.mubr.f32.mxu0 %v112
  %479 = vmatmul.mubr.f32.gmra.mrb[0].mxu0 %v111
  %v480 = vpop.f32.mrb[0].mxu0
  %v481 = vadd.f32 %v351, %v480
  %v482 = vpop.f32.mrb[0].mxu0
  %483 = vmatprep.mubr.f32.mxu0 %v118
  %484 = vmatmul.mubr.f32.gmra.mrb[0].mxu0 %v117
  %v485 = vpop.f32.mrb[0].mxu0
  %v486 = vadd.f32 %v356, %v485
  %v487 = vpop.f32.mrb[0].mxu0
  %488 = vmatprep.mubr.f32.mxu0 %v124
  %489 = vmatmul.mubr.f32.gmra.mrb[0].mxu0 %v123
  %v490 = vpop.f32.mrb[0].mxu0
  %v491 = vadd.f32 %v361, %v490
  %v492 = vpop.f32.mrb[0].mxu0
  %493 = vmatprep.mubr.f32.mxu0 %v130
  %494 = vmatmul.mubr.f32.gmra.mrb[0].mxu0 %v129
  %v495 = vpop.f32.mrb[0].mxu0
  %v496 = vadd.f32 %v366, %v495
  %v497 = vpop.f32.mrb[0].mxu0
  %498 = vmatprep.mubr.f32.mxu0 %v136
  %499 = vmatmul.mubr.f32.gmra.mrb[0].mxu0 %v135
  %v500 = vpop.f32.mrb[0].mxu0
  %v501 = vadd.f32 %v371, %v500
  %v502 = vpop.f32.mrb[0].mxu0
  %503 = vmatprep.mubr.f32.mxu0 %v142
  %504 = vmatmul.mubr.f32.gmra.mrb[0].mxu0 %v141
  %v505 = vpop.f32.mrb[0].mxu0
  %v506 = vadd.f32 %v376, %v505
  %v507 = vpop.f32.mrb[0].mxu0
  %508 = vmatprep.mubr.f32.mxu0 %v148
  %509 = vmatmul.mubr.f32.gmra.mrb[0].mxu0 %v147
  %v510 = vpop.f32.mrb[0].mxu0
  %v511 = vadd.f32 %v381, %v510
  %v512 = vpop.f32.mrb[0].mxu0
  %513 = vdwg.mxu0
  %514 = vmatprep.subr.mxu0 0.0
  %515 = vmatpush1.msra.mxu0 %v215
  %516 = vmatprep.subr.mxu0 0.0
  %517 = vmatpush1.msra.mxu0 %v216
  %518 = vmatprep.subr.mxu0 0.0
  %519 = vmatpush1.msra.mxu0 %v217
  %520 = vmatprep.subr.mxu0 0.0
  %521 = vmatpush1.msra.mxu0 %v218
  %522 = vmatprep.subr.mxu0 0.0
  %523 = vmatpush1.msra.mxu0 %v219
  %524 = vmatprep.subr.mxu0 0.0
  %525 = vmatpush1.msra.mxu0 %v220
  %526 = vmatprep.subr.mxu0 0.0
  %527 = vmatpush1.msra.mxu0 %v221
  %528 = vmatprep.subr.mxu0 0.0
  %529 = vmatpush1.msra.mxu0 %v222
  %530 = vmatprep.subr.mxu0 0.0
  %531 = vmatpush1.msra.mxu0 %v223
  %532 = vmatprep.subr.mxu0 0.0
  %533 = vmatpush1.msra.mxu0 %v224
  %534 = vmatprep.subr.mxu0 0.0
  %535 = vmatpush1.msra.mxu0 %v225
  %536 = vmatprep.subr.mxu0 0.0
  %537 = vmatpush1.msra.mxu0 %v226
  %538 = vmatprep.subr.mxu0 0.0
  %539 = vmatpush1.msra.mxu0 %v227
  %540 = vmatprep.subr.mxu0 0.0
  %541 = vmatpush1.msra.mxu0 %v228
  %542 = vmatprep.subr.mxu0 0.0
  %543 = vmatpush1.msra.mxu0 %v229
  %544 = vmatprep.subr.mxu0 0.0
  %545 = vmatpush1.msra.mxu0 %v230
  %546 = vmatprep.subr.mxu0 0.0
  %547 = vmatpush1.msra.mxu0 %v231
  %548 = vmatprep.subr.mxu0 0.0
  %549 = vmatpush1.msra.mxu0 %v232
  %550 = vmatprep.subr.mxu0 0.0
  %551 = vmatpush1.msra.mxu0 %v233
  %552 = vmatprep.subr.mxu0 0.0
  %553 = vmatpush1.msra.mxu0 %v234
  %554 = vmatprep.subr.mxu0 0.0
  %555 = vmatpush1.msra.mxu0 %v235
  %556 = vmatprep.subr.mxu0 0.0
  %557 = vmatpush1.msra.mxu0 %v236
  %558 = vmatprep.subr.mxu0 0.0
  %559 = vmatpush1.msra.mxu0 %v237
  %560 = vmatprep.subr.mxu0 0.0
  %561 = vmatpush1.msra.mxu0 %v238
  %562 = vmatprep.subr.mxu0 0.0
  %563 = vmatpush1.msra.mxu0 %v239
  %564 = vmatprep.subr.mxu0 0.0
  %565 = vmatpush1.msra.mxu0 %v240
  %566 = vmatprep.subr.mxu0 0.0
  %567 = vmatpush1.msra.mxu0 %v241
  %568 = vmatprep.subr.mxu0 0.0
  %569 = vmatpush1.msra.mxu0 %v242
  %570 = vmatprep.subr.mxu0 0.0
  %571 = vmatpush1.msra.mxu0 %v243
  %572 = vmatprep.subr.mxu0 0.0
  %573 = vmatpush1.msra.mxu0 %v244
  %574 = vmatprep.subr.mxu0 0.0
  %575 = vmatpush1.msra.mxu0 %v245
  %576 = vmatprep.subr.mxu0 0.0
  %577 = vmatpush1.msra.mxu0 %v246
  %578 = vmatprep.mubr.f32.mxu0 %v78
  %579 = vmatmul.mubr.f32.gmra.mrb[0].mxu0 %v77
  %v580 = vpop.f32.mrb[0].mxu0
  %v581 = vadd.f32 %v451, %v580
  %v582 = vpop.f32.mrb[0].mxu0
  %583 = vmatprep.mubr.f32.mxu0 %v84
  %584 = vmatmul.mubr.f32.gmra.mrb[0].mxu0 %v83
  %v585 = vpop.f32.mrb[0].mxu0
  %v586 = vadd.f32 %v456, %v585
  %v587 = vpop.f32.mrb[0].mxu0
  %588 = vmatprep.mubr.f32.mxu0 %v90
  %589 = vmatmul.mubr.f32.gmra.mrb[0].mxu0 %v89
  %v590 = vpop.f32.mrb[0].mxu0
  %v591 = vadd.f32 %v461, %v590
  %v592 = vpop.f32.mrb[0].mxu0
  %593 = vmatprep.mubr.f32.mxu0 %v96
  %594 = vmatmul.mubr.f32.gmra.mrb[0].mxu0 %v95
  %v595 = vpop.f32.mrb[0].mxu0
  %v596 = vadd.f32 %v466, %v595
  %v597 = vpop.f32.mrb[0].mxu0
  %598 = vmatprep.mubr.f32.mxu0 %v102
  %599 = vmatmul.mubr.f32.gmra.mrb[0].mxu0 %v101
  %v600 = vpop.f32.mrb[0].mxu0
  %v601 = vadd.f32 %v471, %v600
  %v602 = vpop.f32.mrb[0].mxu0
  %603 = vmatprep.mubr.f32.mxu0 %v108
  %604 = vmatmul.mubr.f32.gmra.mrb[0].mxu0 %v107
  %v605 = vpop.f32.mrb[0].mxu0
  %v606 = vadd.f32 %v476, %v605
  %v607 = vpop.f32.mrb[0].mxu0
  %608 = vmatprep.mubr.f32.mxu0 %v114
  %609 = vmatmul.mubr.f32.gmra.mrb[0].mxu0 %v113
  %v610 = vpop.f32.mrb[0].mxu0
  %v611 = vadd.f32 %v481, %v610
  %v612 = vpop.f32.mrb[0].mxu0
  %613 = vmatprep.mubr.f32.mxu0 %v120
  %614 = vmatmul.mubr.f32.gmra.mrb[0].mxu0 %v119
  %v615 = vpop.f32.mrb[0].mxu0
  %v616 = vadd.f32 %v486, %v615
  %v617 = vpop.f32.mrb[0].mxu0
  %618 = vmatprep.mubr.f32.mxu0 %v126
  %619 = vmatmul.mubr.f32.gmra.mrb[0].mxu0 %v125
  %v620 = vpop.f32.mrb[0].mxu0
  %v621 = vadd.f32 %v491, %v620
  %v622 = vpop.f32.mrb[0].mxu0
  %623 = vmatprep.mubr.f32.mxu0 %v132
  %624 = vmatmul.mubr.f32.gmra.mrb[0].mxu0 %v131
  %v625 = vpop.f32.mrb[0].mxu0
  %v626 = vadd.f32 %v496, %v625
  %v627 = vpop.f32.mrb[0].mxu0
  %628 = vmatprep.mubr.f32.mxu0 %v138
  %629 = vmatmul.mubr.f32.gmra.mrb[0].mxu0 %v137
  %v630 = vpop.f32.mrb[0].mxu0
  %v631 = vadd.f32 %v501, %v630
  %v632 = vpop.f32.mrb[0].mxu0
  %633 = vmatprep.mubr.f32.mxu0 %v144
  %634 = vmatmul.mubr.f32.gmra.mrb[0].mxu0 %v143
  %v635 = vpop.f32.mrb[0].mxu0
  %v636 = vadd.f32 %v506, %v635
  %v637 = vpop.f32.mrb[0].mxu0
  %638 = vmatprep.mubr.f32.mxu0 %v150
  %639 = vmatmul.mubr.f32.gmra.mrb[0].mxu0 %v149
  %v640 = vpop.f32.mrb[0].mxu0
  %v641 = vadd.f32 %v511, %v640
  %v642 = vpop.f32.mrb[0].mxu0
  %643 = vdwg.mxu0
  %v644 = vmax.f32 %v581, 0.0
  %v645 = vmax.f32 %v586, 0.0
  %v646 = vmax.f32 %v591, 0.0
  %v647 = vmax.f32 %v596, 0.0
  %v648 = vmax.f32 %v601, 0.0
  %v649 = vmax.f32 %v606, 0.0
  %v650 = vmax.f32 %v611, 0.0
  %v651 = vmax.f32 %v616, 0.0
  %v652 = vmax.f32 %v621, 0.0
  %v653 = vmax.f32 %v626, 0.0
  %v654 = vmax.f32 %v631, 0.0
  %v655 = vmax.f32 %v636, 0.0
  %v656 = vmax.f32 %v641, 0.0
  %v657 = vld [vmem:[%s3] sm:$0xff]
  %v658 = vld [vmem:[%s4] sm:$0x1]
  %v660 = vlaneseq
  %v661 = vshrl.u32 %v660, 7
  %v662 = vsub.s32 0, %v661
  %v663 = vrot.slane %v658, %v662
  %vm665 = vcmask 64512
  %v667 = vsel %vm665, %v644, 0
  %v670 = vsel %vm665, %v645, 0
  %v673 = vsel %vm665, %v646, 0
  %v676 = vsel %vm665, %v647, 0
  %v679 = vsel %vm665, %v648, 0
  %v682 = vsel %vm665, %v649, 0
  %v685 = vsel %vm665, %v650, 0
  %v688 = vsel %vm665, %v651, 0
  %v691 = vsel %vm665, %v652, 0
  %v694 = vsel %vm665, %v653, 0
  %v697 = vsel %vm665, %v654, 0
  %v700 = vsel %vm665, %v655, 0
  %v703 = vsel %vm665, %v656, 0
  %705 = vmatprep.subr.mxu0 0.0
  %706 = vmatpush1.msra.mxu0 %v657
  %707 = vmatprep.subr.mxu0 0.0
  %708 = vmatpush1.msra.mxu0 0.0
  %709 = vmatprep.subr.mxu0 0.0
  %710 = vmatpush1.msra.mxu0 0.0
  %711 = vmatprep.subr.mxu0 0.0
  %712 = vmatpush1.msra.mxu0 0.0
  %713 = vmatprep.subr.mxu0 0.0
  %714 = vmatpush1.msra.mxu0 0.0
  %715 = vmatprep.subr.mxu0 0.0
  %716 = vmatpush1.msra.mxu0 0.0
  %717 = vmatprep.subr.mxu0 0.0
  %718 = vmatpush1.msra.mxu0 0.0
  %719 = vmatprep.subr.mxu0 0.0
  %720 = vmatpush1.msra.mxu0 0.0
  %721 = vmatprep.subr.mxu0 0.0
  %722 = vmatpush1.msra.mxu0 0.0
  %723 = vmatprep.subr.mxu0 0.0
  %724 = vmatpush1.msra.mxu0 0.0
  %725 = vmatprep.subr.mxu0 0.0
  %726 = vmatpush1.msra.mxu0 0.0
  %727 = vmatprep.subr.mxu0 0.0
  %728 = vmatpush1.msra.mxu0 0.0
  %729 = vmatprep.subr.mxu0 0.0
  %730 = vmatpush1.msra.mxu0 0.0
  %731 = vmatprep.subr.mxu0 0.0
  %732 = vmatpush1.msra.mxu0 0.0
  %733 = vmatprep.subr.mxu0 0.0
  %734 = vmatpush1.msra.mxu0 0.0
  %735 = vmatprep.subr.mxu0 0.0
  %736 = vmatpush1.msra.mxu0 0.0
  %737 = vmatprep.subr.mxu0 0.0
  %738 = vmatpush1.msra.mxu0 0.0
  %739 = vmatprep.subr.mxu0 0.0
  %740 = vmatpush1.msra.mxu0 0.0
  %741 = vmatprep.subr.mxu0 0.0
  %742 = vmatpush1.msra.mxu0 0.0
  %743 = vmatprep.subr.mxu0 0.0
  %744 = vmatpush1.msra.mxu0 0.0
  %745 = vmatprep.subr.mxu0 0.0
  %746 = vmatpush1.msra.mxu0 0.0
  %747 = vmatprep.subr.mxu0 0.0
  %748 = vmatpush1.msra.mxu0 0.0
  %749 = vmatprep.subr.mxu0 0.0
  %750 = vmatpush1.msra.mxu0 0.0
  %751 = vmatprep.subr.mxu0 0.0
  %752 = vmatpush1.msra.mxu0 0.0
  %753 = vmatprep.subr.mxu0 0.0
  %754 = vmatpush1.msra.mxu0 0.0
  %755 = vmatprep.subr.mxu0 0.0
  %756 = vmatpush1.msra.mxu0 0.0
  %757 = vmatprep.subr.mxu0 0.0
  %758 = vmatpush1.msra.mxu0 0.0
  %759 = vmatprep.subr.mxu0 0.0
  %760 = vmatpush1.msra.mxu0 0.0
  %761 = vmatprep.subr.mxu0 0.0
  %762 = vmatpush1.msra.mxu0 0.0
  %763 = vmatprep.subr.mxu0 0.0
  %764 = vmatpush1.msra.mxu0 0.0
  %765 = vmatprep.subr.mxu0 0.0
  %766 = vmatpush1.msra.mxu0 0.0
  %767 = vmatprep.subr.mxu0 0.0
  %768 = vmatpush1.msra.mxu0 0.0
  %769 = vmatprep.mubr.f32.mxu0 0.0
  %770 = vmatmul.mubr.f32.gmra.mrb[0].mxu0 %v667
  %v771 = vpop.f32.mrb[0].mxu0
  %v772 = vadd.f32 %v663, %v771
  %v773 = vpop.f32.mrb[0].mxu0
  %774 = vmatprep.mubr.f32.mxu0 0.0
  %775 = vmatmul.mubr.f32.gmra.mrb[0].mxu0 %v670
  %v776 = vpop.f32.mrb[0].mxu0
  %v777 = vadd.f32 %v663, %v776
  %v778 = vpop.f32.mrb[0].mxu0
  %779 = vmatprep.mubr.f32.mxu0 0.0
  %780 = vmatmul.mubr.f32.gmra.mrb[0].mxu0 %v673
  %v781 = vpop.f32.mrb[0].mxu0
  %v782 = vadd.f32 %v663, %v781
  %v783 = vpop.f32.mrb[0].mxu0
  %784 = vmatprep.mubr.f32.mxu0 0.0
  %785 = vmatmul.mubr.f32.gmra.mrb[0].mxu0 %v676
  %v786 = vpop.f32.mrb[0].mxu0
  %v787 = vadd.f32 %v663, %v786
  %v788 = vpop.f32.mrb[0].mxu0
  %789 = vmatprep.mubr.f32.mxu0 0.0
  %790 = vmatmul.mubr.f32.gmra.mrb[0].mxu0 %v679
  %v791 = vpop.f32.mrb[0].mxu0
  %v792 = vadd.f32 %v663, %v791
  %v793 = vpop.f32.mrb[0].mxu0
  %794 = vmatprep.mubr.f32.mxu0 0.0
  %795 = vmatmul.mubr.f32.gmra.mrb[0].mxu0 %v682
  %v796 = vpop.f32.mrb[0].mxu0
  %v797 = vadd.f32 %v663, %v796
  %v798 = vpop.f32.mrb[0].mxu0
  %799 = vmatprep.mubr.f32.mxu0 0.0
  %800 = vmatmul.mubr.f32.gmra.mrb[0].mxu0 %v685
  %v801 = vpop.f32.mrb[0].mxu0
  %v802 = vadd.f32 %v663, %v801
  %v803 = vpop.f32.mrb[0].mxu0
  %804 = vmatprep.mubr.f32.mxu0 0.0
  %805 = vmatmul.mubr.f32.gmra.mrb[0].mxu0 %v688
  %v806 = vpop.f32.mrb[0].mxu0
  %v807 = vadd.f32 %v663, %v806
  %v808 = vpop.f32.mrb[0].mxu0
  %809 = vmatprep.mubr.f32.mxu0 0.0
  %810 = vmatmul.mubr.f32.gmra.mrb[0].mxu0 %v691
  %v811 = vpop.f32.mrb[0].mxu0
  %v812 = vadd.f32 %v663, %v811
  %v813 = vpop.f32.mrb[0].mxu0
  %814 = vmatprep.mubr.f32.mxu0 0.0
  %815 = vmatmul.mubr.f32.gmra.mrb[0].mxu0 %v694
  %v816 = vpop.f32.mrb[0].mxu0
  %v817 = vadd.f32 %v663, %v816
  %v818 = vpop.f32.mrb[0].mxu0
  %819 = vmatprep.mubr.f32.mxu0 0.0
  %820 = vmatmul.mubr.f32.gmra.mrb[0].mxu0 %v697
  %v821 = vpop.f32.mrb[0].mxu0
  %v822 = vadd.f32 %v663, %v821
  %v823 = vpop.f32.mrb[0].mxu0
  %824 = vmatprep.mubr.f32.mxu0 0.0
  %825 = vmatmul.mubr.f32.gmra.mrb[0].mxu0 %v700
  %v826 = vpop.f32.mrb[0].mxu0
  %v827 = vadd.f32 %v663, %v826
  %v828 = vpop.f32.mrb[0].mxu0
  %829 = vmatprep.mubr.f32.mxu0 0.0
  %830 = vmatmul.mubr.f32.gmra.mrb[0].mxu0 %v703
  %v831 = vpop.f32.mrb[0].mxu0
  %v832 = vadd.f32 %v663, %v831
  %v833 = vpop.f32.mrb[0].mxu0
  %834 = vdwg.mxu0
  %v835 = vmax.f32 %v772, 0.0
  %v836 = vmax.f32 %v777, 0.0
  %v837 = vmax.f32 %v782, 0.0
  %v838 = vmax.f32 %v787, 0.0
  %v839 = vmax.f32 %v792, 0.0
  %v840 = vmax.f32 %v797, 0.0
  %v841 = vmax.f32 %v802, 0.0
  %v842 = vmax.f32 %v807, 0.0
  %v843 = vmax.f32 %v812, 0.0
  %v844 = vmax.f32 %v817, 0.0
  %v845 = vmax.f32 %v822, 0.0
  %v846 = vmax.f32 %v827, 0.0
  %v847 = vmax.f32 %v832, 0.0
  %v848 = vld [vmem:[%s5] sm:$0xff]
  %v849 = vld [vmem:[%s6] sm:$0x1]
  %v851 = vlaneseq
  %v852 = vshrl.u32 %v851, 7
  %v853 = vsub.s32 0, %v852
  %v854 = vrot.slane %v849, %v853
  %v857 = vsel %vm665, %v835, 0
  %v860 = vsel %vm665, %v836, 0
  %v863 = vsel %vm665, %v837, 0
  %v866 = vsel %vm665, %v838, 0
  %v869 = vsel %vm665, %v839, 0
  %v872 = vsel %vm665, %v840, 0
  %v875 = vsel %vm665, %v841, 0
  %v878 = vsel %vm665, %v842, 0
  %v881 = vsel %vm665, %v843, 0
  %v884 = vsel %vm665, %v844, 0
  %v887 = vsel %vm665, %v845, 0
  %v890 = vsel %vm665, %v846, 0
  %v893 = vsel %vm665, %v847, 0
  %895 = vmatprep.subr.mxu0 0.0
  %896 = vmatpush1.msra.mxu0 %v848
  %897 = vmatprep.subr.mxu0 0.0
  %898 = vmatpush1.msra.mxu0 0.0
  %899 = vmatprep.subr.mxu0 0.0
  %900 = vmatpush1.msra.mxu0 0.0
  %901 = vmatprep.subr.mxu0 0.0
  %902 = vmatpush1.msra.mxu0 0.0
  %903 = vmatprep.subr.mxu0 0.0
  %904 = vmatpush1.msra.mxu0 0.0
  %905 = vmatprep.subr.mxu0 0.0
  %906 = vmatpush1.msra.mxu0 0.0
  %907 = vmatprep.subr.mxu0 0.0
  %908 = vmatpush1.msra.mxu0 0.0
  %909 = vmatprep.subr.mxu0 0.0
  %910 = vmatpush1.msra.mxu0 0.0
  %911 = vmatprep.subr.mxu0 0.0
  %912 = vmatpush1.msra.mxu0 0.0
  %913 = vmatprep.subr.mxu0 0.0
  %914 = vmatpush1.msra.mxu0 0.0
  %915 = vmatprep.subr.mxu0 0.0
  %916 = vmatpush1.msra.mxu0 0.0
  %917 = vmatprep.subr.mxu0 0.0
  %918 = vmatpush1.msra.mxu0 0.0
  %919 = vmatprep.subr.mxu0 0.0
  %920 = vmatpush1.msra.mxu0 0.0
  %921 = vmatprep.subr.mxu0 0.0
  %922 = vmatpush1.msra.mxu0 0.0
  %923 = vmatprep.subr.mxu0 0.0
  %924 = vmatpush1.msra.mxu0 0.0
  %925 = vmatprep.subr.mxu0 0.0
  %926 = vmatpush1.msra.mxu0 0.0
  %927 = vmatprep.subr.mxu0 0.0
  %928 = vmatpush1.msra.mxu0 0.0
  %929 = vmatprep.subr.mxu0 0.0
  %930 = vmatpush1.msra.mxu0 0.0
  %931 = vmatprep.subr.mxu0 0.0
  %932 = vmatpush1.msra.mxu0 0.0
  %933 = vmatprep.subr.mxu0 0.0
  %934 = vmatpush1.msra.mxu0 0.0
  %935 = vmatprep.subr.mxu0 0.0
  %936 = vmatpush1.msra.mxu0 0.0
  %937 = vmatprep.subr.mxu0 0.0
  %938 = vmatpush1.msra.mxu0 0.0
  %939 = vmatprep.subr.mxu0 0.0
  %940 = vmatpush1.msra.mxu0 0.0
  %941 = vmatprep.subr.mxu0 0.0
  %942 = vmatpush1.msra.mxu0 0.0
  %943 = vmatprep.subr.mxu0 0.0
  %944 = vmatpush1.msra.mxu0 0.0
  %945 = vmatprep.subr.mxu0 0.0
  %946 = vmatpush1.msra.mxu0 0.0
  %947 = vmatprep.subr.mxu0 0.0
  %948 = vmatpush1.msra.mxu0 0.0
  %949 = vmatprep.subr.mxu0 0.0
  %950 = vmatpush1.msra.mxu0 0.0
  %951 = vmatprep.subr.mxu0 0.0
  %952 = vmatpush1.msra.mxu0 0.0
  %953 = vmatprep.subr.mxu0 0.0
  %954 = vmatpush1.msra.mxu0 0.0
  %955 = vmatprep.subr.mxu0 0.0
  %956 = vmatpush1.msra.mxu0 0.0
  %957 = vmatprep.subr.mxu0 0.0
  %958 = vmatpush1.msra.mxu0 0.0
  %959 = vmatprep.mubr.f32.mxu0 0.0
  %960 = vmatmul.mubr.f32.gmra.mrb[0].mxu0 %v857
  %v961 = vpop.f32.mrb[0].mxu0
  %v962 = vadd.f32 %v854, %v961
  %v963 = vpop.f32.mrb[0].mxu0
  %964 = vmatprep.mubr.f32.mxu0 0.0
  %965 = vmatmul.mubr.f32.gmra.mrb[0].mxu0 %v860
  %v966 = vpop.f32.mrb[0].mxu0
  %v967 = vadd.f32 %v854, %v966
  %v968 = vpop.f32.mrb[0].mxu0
  %969 = vmatprep.mubr.f32.mxu0 0.0
  %970 = vmatmul.mubr.f32.gmra.mrb[0].mxu0 %v863
  %v971 = vpop.f32.mrb[0].mxu0
  %v972 = vadd.f32 %v854, %v971
  %v973 = vpop.f32.mrb[0].mxu0
  %974 = vmatprep.mubr.f32.mxu0 0.0
  %975 = vmatmul.mubr.f32.gmra.mrb[0].mxu0 %v866
  %v976 = vpop.f32.mrb[0].mxu0
  %v977 = vadd.f32 %v854, %v976
  %v978 = vpop.f32.mrb[0].mxu0
  %979 = vmatprep.mubr.f32.mxu0 0.0
  %980 = vmatmul.mubr.f32.gmra.mrb[0].mxu0 %v869
  %v981 = vpop.f32.mrb[0].mxu0
  %v982 = vadd.f32 %v854, %v981
  %v983 = vpop.f32.mrb[0].mxu0
  %984 = vmatprep.mubr.f32.mxu0 0.0
  %985 = vmatmul.mubr.f32.gmra.mrb[0].mxu0 %v872
  %v986 = vpop.f32.mrb[0].mxu0
  %v987 = vadd.f32 %v854, %v986
  %v988 = vpop.f32.mrb[0].mxu0
  %989 = vmatprep.mubr.f32.mxu0 0.0
  %990 = vmatmul.mubr.f32.gmra.mrb[0].mxu0 %v875
  %v991 = vpop.f32.mrb[0].mxu0
  %v992 = vadd.f32 %v854, %v991
  %v993 = vpop.f32.mrb[0].mxu0
  %994 = vmatprep.mubr.f32.mxu0 0.0
  %995 = vmatmul.mubr.f32.gmra.mrb[0].mxu0 %v878
  %v996 = vpop.f32.mrb[0].mxu0
  %v997 = vadd.f32 %v854, %v996
  %v998 = vpop.f32.mrb[0].mxu0
  %999 = vmatprep.mubr.f32.mxu0 0.0
  %1000 = vmatmul.mubr.f32.gmra.mrb[0].mxu0 %v881
  %v1001 = vpop.f32.mrb[0].mxu0
  %v1002 = vadd.f32 %v854, %v1001
  %v1003 = vpop.f32.mrb[0].mxu0
  %1004 = vmatprep.mubr.f32.mxu0 0.0
  %1005 = vmatmul.mubr.f32.gmra.mrb[0].mxu0 %v884
  %v1006 = vpop.f32.mrb[0].mxu0
  %v1007 = vadd.f32 %v854, %v1006
  %v1008 = vpop.f32.mrb[0].mxu0
  %1009 = vmatprep.mubr.f32.mxu0 0.0
  %1010 = vmatmul.mubr.f32.gmra.mrb[0].mxu0 %v887
  %v1011 = vpop.f32.mrb[0].mxu0
  %v1012 = vadd.f32 %v854, %v1011
  %v1013 = vpop.f32.mrb[0].mxu0
  %1014 = vmatprep.mubr.f32.mxu0 0.0
  %1015 = vmatmul.mubr.f32.gmra.mrb[0].mxu0 %v890
  %v1016 = vpop.f32.mrb[0].mxu0
  %v1017 = vadd.f32 %v854, %v1016
  %v1018 = vpop.f32.mrb[0].mxu0
  %1019 = vmatprep.mubr.f32.mxu0 0.0
  %1020 = vmatmul.mubr.f32.gmra.mrb[0].mxu0 %v893
  %v1021 = vpop.f32.mrb[0].mxu0
  %v1022 = vadd.f32 %v854, %v1021
  %v1023 = vpop.f32.mrb[0].mxu0
  %1024 = vdwg.mxu0
  %v1025 = vmax.f32 %v962, 0.0
  %v1026 = vmax.f32 %v967, 0.0
  %v1027 = vmax.f32 %v972, 0.0
  %v1028 = vmax.f32 %v977, 0.0
  %v1029 = vmax.f32 %v982, 0.0
  %v1030 = vmax.f32 %v987, 0.0
  %v1031 = vmax.f32 %v992, 0.0
  %v1032 = vmax.f32 %v997, 0.0
  %v1033 = vmax.f32 %v1002, 0.0
  %v1034 = vmax.f32 %v1007, 0.0
  %v1035 = vmax.f32 %v1012, 0.0
  %v1036 = vmax.f32 %v1017, 0.0
  %v1037 = vmax.f32 %v1022, 0.0
  %v1038 = vld [vmem:[%s7] sm:$0xff]
  %v1039 = vld [vmem:[#allocation2] sm:$0x1]
  %v1041 = vlaneseq
  %v1042 = vshrl.u32 %v1041, 7
  %v1043 = vsub.s32 0, %v1042
  %v1044 = vrot.slane %v1039, %v1043
  %v1047 = vsel %vm665, %v1025, 0
  %v1050 = vsel %vm665, %v1026, 0
  %v1053 = vsel %vm665, %v1027, 0
  %v1056 = vsel %vm665, %v1028, 0
  %v1059 = vsel %vm665, %v1029, 0
  %v1062 = vsel %vm665, %v1030, 0
  %v1065 = vsel %vm665, %v1031, 0
  %v1068 = vsel %vm665, %v1032, 0
  %v1071 = vsel %vm665, %v1033, 0
  %v1074 = vsel %vm665, %v1034, 0
  %v1077 = vsel %vm665, %v1035, 0
  %v1080 = vsel %vm665, %v1036, 0
  %v1083 = vsel %vm665, %v1037, 0
  %1085 = vmatprep.subr.mxu0 0.0
  %1086 = vmatpush1.msra.mxu0 %v1038
  %1087 = vmatprep.subr.mxu0 0.0
  %1088 = vmatpush1.msra.mxu0 0.0
  %1089 = vmatprep.subr.mxu0 0.0
  %1090 = vmatpush1.msra.mxu0 0.0
  %1091 = vmatprep.subr.mxu0 0.0
  %1092 = vmatpush1.msra.mxu0 0.0
  %1093 = vmatprep.subr.mxu0 0.0
  %1094 = vmatpush1.msra.mxu0 0.0
  %1095 = vmatprep.subr.mxu0 0.0
  %1096 = vmatpush1.msra.mxu0 0.0
  %1097 = vmatprep.subr.mxu0 0.0
  %1098 = vmatpush1.msra.mxu0 0.0
  %1099 = vmatprep.subr.mxu0 0.0
  %1100 = vmatpush1.msra.mxu0 0.0
  %1101 = vmatprep.subr.mxu0 0.0
  %1102 = vmatpush1.msra.mxu0 0.0
  %1103 = vmatprep.subr.mxu0 0.0
  %1104 = vmatpush1.msra.mxu0 0.0
  %1105 = vmatprep.subr.mxu0 0.0
  %1106 = vmatpush1.msra.mxu0 0.0
  %1107 = vmatprep.subr.mxu0 0.0
  %1108 = vmatpush1.msra.mxu0 0.0
  %1109 = vmatprep.subr.mxu0 0.0
  %1110 = vmatpush1.msra.mxu0 0.0
  %1111 = vmatprep.subr.mxu0 0.0
  %1112 = vmatpush1.msra.mxu0 0.0
  %1113 = vmatprep.subr.mxu0 0.0
  %1114 = vmatpush1.msra.mxu0 0.0
  %1115 = vmatprep.subr.mxu0 0.0
  %1116 = vmatpush1.msra.mxu0 0.0
  %1117 = vmatprep.subr.mxu0 0.0
  %1118 = vmatpush1.msra.mxu0 0.0
  %1119 = vmatprep.subr.mxu0 0.0
  %1120 = vmatpush1.msra.mxu0 0.0
  %1121 = vmatprep.subr.mxu0 0.0
  %1122 = vmatpush1.msra.mxu0 0.0
  %1123 = vmatprep.subr.mxu0 0.0
  %1124 = vmatpush1.msra.mxu0 0.0
  %1125 = vmatprep.subr.mxu0 0.0
  %1126 = vmatpush1.msra.mxu0 0.0
  %1127 = vmatprep.subr.mxu0 0.0
  %1128 = vmatpush1.msra.mxu0 0.0
  %1129 = vmatprep.subr.mxu0 0.0
  %1130 = vmatpush1.msra.mxu0 0.0
  %1131 = vmatprep.subr.mxu0 0.0
  %1132 = vmatpush1.msra.mxu0 0.0
  %1133 = vmatprep.subr.mxu0 0.0
  %1134 = vmatpush1.msra.mxu0 0.0
  %1135 = vmatprep.subr.mxu0 0.0
  %1136 = vmatpush1.msra.mxu0 0.0
  %1137 = vmatprep.subr.mxu0 0.0
  %1138 = vmatpush1.msra.mxu0 0.0
  %1139 = vmatprep.subr.mxu0 0.0
  %1140 = vmatpush1.msra.mxu0 0.0
  %1141 = vmatprep.subr.mxu0 0.0
  %1142 = vmatpush1.msra.mxu0 0.0
  %1143 = vmatprep.subr.mxu0 0.0
  %1144 = vmatpush1.msra.mxu0 0.0
  %1145 = vmatprep.subr.mxu0 0.0
  %1146 = vmatpush1.msra.mxu0 0.0
  %1147 = vmatprep.subr.mxu0 0.0
  %1148 = vmatpush1.msra.mxu0 0.0
  %1149 = vmatprep.mubr.f32.mxu0 0.0
  %1150 = vmatmul.mubr.f32.gmra.mrb[0].mxu0 %v1047
  %v1151 = vpop.f32.mrb[0].mxu0
  %v1152 = vadd.f32 %v1044, %v1151
  %v1153 = vpop.f32.mrb[0].mxu0
  %1154 = vmatprep.mubr.f32.mxu0 0.0
  %1155 = vmatmul.mubr.f32.gmra.mrb[0].mxu0 %v1050
  %v1156 = vpop.f32.mrb[0].mxu0
  %v1157 = vadd.f32 %v1044, %v1156
  %v1158 = vpop.f32.mrb[0].mxu0
  %1159 = vmatprep.mubr.f32.mxu0 0.0
  %1160 = vmatmul.mubr.f32.gmra.mrb[0].mxu0 %v1053
  %v1161 = vpop.f32.mrb[0].mxu0
  %v1162 = vadd.f32 %v1044, %v1161
  %v1163 = vpop.f32.mrb[0].mxu0
  %1164 = vmatprep.mubr.f32.mxu0 0.0
  %1165 = vmatmul.mubr.f32.gmra.mrb[0].mxu0 %v1056
  %v1166 = vpop.f32.mrb[0].mxu0
  %v1167 = vadd.f32 %v1044, %v1166
  %v1168 = vpop.f32.mrb[0].mxu0
  %1169 = vmatprep.mubr.f32.mxu0 0.0
  %1170 = vmatmul.mubr.f32.gmra.mrb[0].mxu0 %v1059
  %v1171 = vpop.f32.mrb[0].mxu0
  %v1172 = vadd.f32 %v1044, %v1171
  %v1173 = vpop.f32.mrb[0].mxu0
  %1174 = vmatprep.mubr.f32.mxu0 0.0
  %1175 = vmatmul.mubr.f32.gmra.mrb[0].mxu0 %v1062
  %v1176 = vpop.f32.mrb[0].mxu0
  %v1177 = vadd.f32 %v1044, %v1176
  %v1178 = vpop.f32.mrb[0].mxu0
  %1179 = vmatprep.mubr.f32.mxu0 0.0
  %1180 = vmatmul.mubr.f32.gmra.mrb[0].mxu0 %v1065
  %v1181 = vpop.f32.mrb[0].mxu0
  %v1182 = vadd.f32 %v1044, %v1181
  %v1183 = vpop.f32.mrb[0].mxu0
  %1184 = vmatprep.mubr.f32.mxu0 0.0
  %1185 = vmatmul.mubr.f32.gmra.mrb[0].mxu0 %v1068
  %v1186 = vpop.f32.mrb[0].mxu0
  %v1187 = vadd.f32 %v1044, %v1186
  %v1188 = vpop.f32.mrb[0].mxu0
  %1189 = vmatprep.mubr.f32.mxu0 0.0
  %1190 = vmatmul.mubr.f32.gmra.mrb[0].mxu0 %v1071
  %v1191 = vpop.f32.mrb[0].mxu0
  %v1192 = vadd.f32 %v1044, %v1191
  %v1193 = vpop.f32.mrb[0].mxu0
  %1194 = vmatprep.mubr.f32.mxu0 0.0
  %1195 = vmatmul.mubr.f32.gmra.mrb[0].mxu0 %v1074
  %v1196 = vpop.f32.mrb[0].mxu0
  %v1197 = vadd.f32 %v1044, %v1196
  %v1198 = vpop.f32.mrb[0].mxu0
  %1199 = vmatprep.mubr.f32.mxu0 0.0
  %1200 = vmatmul.mubr.f32.gmra.mrb[0].mxu0 %v1077
  %v1201 = vpop.f32.mrb[0].mxu0
  %v1202 = vadd.f32 %v1044, %v1201
  %v1203 = vpop.f32.mrb[0].mxu0
  %1204 = vmatprep.mubr.f32.mxu0 0.0
  %1205 = vmatmul.mubr.f32.gmra.mrb[0].mxu0 %v1080
  %v1206 = vpop.f32.mrb[0].mxu0
  %v1207 = vadd.f32 %v1044, %v1206
  %v1208 = vpop.f32.mrb[0].mxu0
  %1209 = vmatprep.mubr.f32.mxu0 0.0
  %1210 = vmatmul.mubr.f32.gmra.mrb[0].mxu0 %v1083
  %v1211 = vpop.f32.mrb[0].mxu0
  %v1212 = vadd.f32 %v1044, %v1211
  %v1213 = vpop.f32.mrb[0].mxu0
  %1214 = vdwg.mxu0
  %vm1215 = vcmask 7168
  %1216 = vst.msk [vmem:[%s9] sm:$0xff] %vm1215, %v1152
  %1217 = vst.msk [vmem:[%s9 + $0x8] sm:$0xff] %vm1215, %v1157
  %1218 = vst.msk [vmem:[%s9 + $0x10] sm:$0xff] %vm1215, %v1162
  %1219 = vst.msk [vmem:[%s9 + $0x18] sm:$0xff] %vm1215, %v1167
  %1220 = vst.msk [vmem:[%s9 + $0x20] sm:$0xff] %vm1215, %v1172
  %1221 = vst.msk [vmem:[%s9 + $0x28] sm:$0xff] %vm1215, %v1177
  %1222 = vst.msk [vmem:[%s9 + $0x30] sm:$0xff] %vm1215, %v1182
  %1223 = vst.msk [vmem:[%s9 + $0x38] sm:$0xff] %vm1215, %v1187
  %1224 = vst.msk [vmem:[%s9 + $0x40] sm:$0xff] %vm1215, %v1192
  %1225 = vst.msk [vmem:[%s9 + $0x48] sm:$0xff] %vm1215, %v1197
  %1226 = vst.msk [vmem:[%s9 + $0x50] sm:$0xff] %vm1215, %v1202
  %1227 = vst.msk [vmem:[%s9 + $0x58] sm:$0xff] %vm1215, %v1207
  %1228 = vst.msk [vmem:[%s9 + $0x60] sm:$0xff] %vm1215, %v1212
  // Predicated region
  $region38: #{tpu_custom_call.1} parent=0 // pred_check
    _
  $region39: #{tpu_custom_call.1} parent=0 // pred_check_branch
    %1230 = sbr.rel (0) target = $region41
  $region40: #{tpu_custom_call.1} parent=0 // pred_region
    _
  $region41: #{tpu_custom_call.1} parent=0 // pred_fallthru
    _
  // Predicated region
  $region42: #{tpu_custom_call.1} parent=0 // pred_check
    _
  $region43: #{tpu_custom_call.1} parent=0 // pred_check_branch
    %1232 = sbr.rel (0) target = $region45
  $region44: #{tpu_custom_call.1} parent=0 // pred_region
    _
  $region45: #{tpu_custom_call.1} parent=0 // pred_fallthru
    _

</llo_original>
